<compile_context>
chip_gen: v5e
topology: v5e:2x2
jax: 0.10.0
libtpu: 0.0.40
codegen_flags: <defaults>
</compile_context>

<pallas_src>
from functools import partial

import jax
import jax.numpy as jnp
from jax import lax
from jax.experimental import pallas as pl
from jax.experimental.pallas import tpu as pltpu


# ------------------------------ fused kernel ------------------------------- #

def _fused_premodel_kernel(scal_ref,      # SMEM [L+1]: PReLU slopes..., 1/num_mask
                           x_ref,         # [N, Din]   f32  original feats (loss)
                           usex_ref,      # [N, DW]    bf16 masked/noised feats (enc input)
                           msk_ref,       # [N, 1]     f32  1.0 on mask nodes
                           a_ref,         # [N, N]     bf16 normalized adjacency
                           encw_ref,      # [L, DW, H] bf16 stacked encoder weights
                           encb_ref,      # [L, 1, H]  f32  stacked encoder biases
                           e2dw_ref,      # [H, H]     bf16 encoder_to_decoder
                           decw_ref,      # [H, Din]   bf16 decoder GCN weight
                           decb_ref,      # [1, Din]   f32  decoder GCN bias
                           out_ref,       # [1, 1]     f32  SCE loss
                           *, num_layers, num_hidden, alpha):
    a = a_ref[...]                                   # bf16 MXU operand
    mmask = msk_ref[...]                             # f32

    # --- encoder: num_layers GCN layers, PReLU every layer (encoding=True) ---
    h = usex_ref[...]                                # bf16
    for l in range(num_layers):
        w_full = encw_ref[l]                         # [DW, H] bf16
        w = w_full if l == 0 else w_full[:num_hidden, :]
        b = encb_ref[l]                              # [1, H] f32
        slope = scal_ref[l]
        t = jnp.dot(h, w, preferred_element_type=jnp.float32)          # [N, H] f32
        agg = jnp.dot(a, t.astype(jnp.bfloat16),
                      preferred_element_type=jnp.float32) + b
        h_f32 = jnp.where(agg >= 0.0, agg, slope * agg)                 # PReLU (f32 VPU)
        h = h_f32.astype(jnp.bfloat16)

    # --- encoder_to_decoder: Linear(hidden, hidden, bias=False) + re-mask ---
    rep = jnp.dot(h, e2dw_ref[...], preferred_element_type=jnp.float32)
    rep = rep * (1.0 - mmask)                        # rep[mask_nodes] = 0

    # --- decoder: single GCN layer, no activation ---
    t = jnp.dot(rep.astype(jnp.bfloat16), decw_ref[...],
                preferred_element_type=jnp.float32)
    recon = jnp.dot(a, t.astype(jnp.bfloat16),
                    preferred_element_type=jnp.float32) + decb_ref[...]

    # --- SCE loss over masked rows: mean((1 - cos(recon_i, x_i))^alpha) ---
    x = x_ref[...]
    eps = 1e-12
    xn = x * lax.rsqrt(jnp.maximum(jnp.sum(x * x, axis=-1, keepdims=True), eps))
    rn = recon * lax.rsqrt(
        jnp.maximum(jnp.sum(recon * recon, axis=-1, keepdims=True), eps))
    cos = jnp.sum(xn * rn, axis=-1, keepdims=True)                      # [N, 1]
    base = jnp.maximum(1.0 - cos, 0.0)               # clamp: no NaN if cos rounds > 1
    if float(alpha) == int(alpha) and int(alpha) >= 1:
        p = base
        for _ in range(int(alpha) - 1):              # alpha_l=2 -> one VPU mul
            p = p * base
    else:
        p = base ** alpha
    inv_num_mask = scal_ref[num_layers]
    out_ref[...] = jnp.sum(p * mmask, keepdims=True) * inv_num_mask


# --------------------------- parameter construction ------------------------ #

def init_params(key, in_dim, num_hidden, num_layers):
    """Glorot-init on original (unpadded) shapes."""
    keys = jax.random.split(key, num_layers + 2)

    def glorot(k, fan_in, fan_out):
        lim = jnp.sqrt(6.0 / (fan_in + fan_out))
        return jax.random.uniform(k, (fan_in, fan_out), jnp.float32, -lim, lim)

    enc_w, enc_b, slopes = [], [], []
    d_prev = in_dim
    for l in range(num_layers):
        enc_w.append(glorot(keys[l], d_prev, num_hidden))
        enc_b.append(jnp.zeros((num_hidden,), jnp.float32))
        slopes.append(jnp.float32(0.25))             # PReLU default init
        d_prev = num_hidden

    return dict(
        enc_w=enc_w, enc_b=enc_b, slopes=slopes,
        dec_w=glorot(keys[num_layers], num_hidden, in_dim),   # decoder: hidden -> in_dim
        dec_b=jnp.zeros((in_dim,), jnp.float32),
        e2d_w=glorot(keys[num_layers + 1], num_hidden, num_hidden),
        enc_mask_token=jnp.zeros((1, in_dim), jnp.float32),   # nn.Parameter(zeros(1, in_dim))
    )


# --------------------------- host-side mask plan --------------------------- #

def _encoding_mask_noise(key, x, mask_token, mask_rate, replace_rate):
    """Mirrors PreModel.encoding_mask_noise.  Index plan + the (tiny) row scatter
    run on the host (randperm has no clean Pallas equivalent); emits the already
    masked/noised features plus a dense mask-node indicator."""
    n = x.shape[0]
    k1, k2, k3 = jax.random.split(key, 3)
    perm = jax.random.permutation(k1, n)
    num_mask = int(mask_rate * n)
    mask_nodes = perm[:num_mask]
    mask_token_rate = 1.0 - replace_rate

    out_x = x
    if replace_rate > 0:
        num_noise = int(replace_rate * num_mask)
        perm_mask = jax.random.permutation(k2, num_mask)
        token_nodes = mask_nodes[perm_mask[:int(mask_token_rate * num_mask)]]
        out_x = out_x.at[token_nodes].set(0.0)
        if num_noise > 0:
            noise_nodes = mask_nodes[perm_mask[num_mask - num_noise:]]
            noise_src = jax.random.permutation(k3, n)[:num_noise]
            out_x = out_x.at[noise_nodes].set(x[noise_src])
    else:
        token_nodes = mask_nodes
        out_x = out_x.at[mask_nodes].set(0.0)
    out_x = out_x.at[token_nodes].add(mask_token[0])

    mask_mask = jnp.zeros((n, 1), jnp.float32).at[mask_nodes, 0].set(1.0)
    return out_x, mask_mask, num_mask


# ------------------------------- forward pass ------------------------------ #

def premodel_forward(params, x, a_norm, mask_key, *,
                     mask_rate=0.3, replace_rate=0.1, alpha_l=2.0):
    """PreModel.forward -> scalar loss; everything after the host-side mask plan
    runs in one fused Pallas kernel."""
    n, in_dim = x.shape
    num_layers = len(params["enc_w"])
    num_hidden = params["e2d_w"].shape[0]
    dw = max(in_dim, num_hidden)                     # stacked-weight contraction dim

    use_x, mask_mask, num_mask = _encoding_mask_noise(
        mask_key, x, params["enc_mask_token"], mask_rate, replace_rate)

    # bf16 MXU operands; zero-pad only what weight stacking needs (no 128 padding).
    use_x_b = jnp.pad(use_x, ((0, 0), (0, dw - in_dim))).astype(jnp.bfloat16)
    a_b = a_norm.astype(jnp.bfloat16)
    enc_w = jnp.stack(
        [jnp.pad(w, ((0, dw - w.shape[0]), (0, 0))) for w in params["enc_w"]]
    ).astype(jnp.bfloat16)                                           # [L, DW, H]
    enc_b = jnp.stack([b.reshape(1, -1) for b in params["enc_b"]])   # [L, 1, H] f32
    e2d_w = params["e2d_w"].astype(jnp.bfloat16)
    dec_w = params["dec_w"].astype(jnp.bfloat16)
    dec_b = params["dec_b"].reshape(1, -1)                           # [1, Din] f32

    # scalars via SMEM: PReLU slopes per encoder layer + 1/num_mask
    scalars = jnp.stack(list(params["slopes"])
                        + [jnp.float32(1.0 / max(num_mask, 1))])

    inputs = [scalars, x, use_x_b, mask_mask, a_b,
              enc_w, enc_b, e2d_w, dec_w, dec_b]

    vmem = pl.BlockSpec(memory_space=pltpu.MemorySpace.VMEM)
    smem = pl.BlockSpec(memory_space=pltpu.MemorySpace.SMEM)
    in_specs = [smem] + [vmem] * (len(inputs) - 1)

    # Advisory cost estimate so XLA schedules around the fused call sensibly.
    flops = (2 * (n * dw * num_hidden + n * n * num_hidden)                    # enc layer 0
             + 2 * (num_layers - 1) * (n * num_hidden * num_hidden
                                       + n * n * num_hidden)                   # enc layers 1..
             + 2 * n * num_hidden * num_hidden                                 # enc->dec
             + 2 * (n * num_hidden * in_dim + n * n * in_dim))                 # decoder
    bytes_accessed = sum(int(t.size) * t.dtype.itemsize for t in inputs) + 4
    cost = pl.CostEstimate(flops=int(flops), transcendentals=2 * n,
                           bytes_accessed=int(bytes_accessed))

    loss = pl.pallas_call(
        partial(_fused_premodel_kernel, num_layers=num_layers,
                num_hidden=num_hidden, alpha=alpha_l),
        out_shape=jax.ShapeDtypeStruct((1, 1), jnp.float32),
        in_specs=in_specs,
        out_specs=pl.BlockSpec(memory_space=pltpu.MemorySpace.VMEM),
        cost_estimate=cost,
    )(*inputs)
    return loss[0, 0]


# ----------------------------------- main ----------------------------------- #

if __name__ == "__main__":
    N, in_dim, num_hidden, num_layers = 64, 16, 32, 2

    root = jax.random.PRNGKey(0)
    k_x, k_adj, k_params, k_mask = jax.random.split(root, 4)

    # node features
    x = jax.random.normal(k_x, (N, in_dim), jnp.float32)

    # random symmetric graph -> dense symmetrically-normalized adjacency
    # (stands in for the SparseTensor edge_index)
    probs = jax.random.uniform(k_adj, (N, N))
    adj = (probs < 0.1).astype(jnp.float32)
    adj = jnp.maximum(adj, adj.T)
    eye = jnp.eye(N, dtype=jnp.float32)
    adj = adj * (1.0 - eye) + eye
    deg = adj.sum(axis=1)
    dinv = 1.0 / jnp.sqrt(jnp.maximum(deg, 1.0))
    a_norm = adj * dinv[:, None] * dinv[None, :]

    params = init_params(k_params, in_dim, num_hidden, num_layers)

    loss = premodel_forward(params, x, a_norm, k_mask,
                            mask_rate=0.3, replace_rate=0.1, alpha_l=2.0)
    jax.block_until_ready(loss)
    loss_item = {"loss": float(loss)}  # .item() equivalent (host side)

    assert jnp.isfinite(loss)
    print("KERNEL_OK")
</pallas_src>

<mosaic_0001>
module attributes {stable_mosaic.version = 11 : i64} {
  func.func @_fused_premodel_kernel(%arg0: memref<3xf32, #tpu.memory_space<smem>>, %arg1: memref<64x16xf32, #tpu.memory_space<vmem>>, %arg2: memref<64x32xbf16, #tpu.memory_space<vmem>>, %arg3: memref<64x1xf32, #tpu.memory_space<vmem>>, %arg4: memref<64x64xbf16, #tpu.memory_space<vmem>>, %arg5: memref<2x32x32xbf16, #tpu.memory_space<vmem>>, %arg6: memref<2x1x32xf32, #tpu.memory_space<vmem>>, %arg7: memref<32x32xbf16, #tpu.memory_space<vmem>>, %arg8: memref<32x16xbf16, #tpu.memory_space<vmem>>, %arg9: memref<1x16xf32, #tpu.memory_space<vmem>>, %arg10: memref<1x1xf32, #tpu.memory_space<vmem>>) attributes {dimension_semantics = [], scalar_prefetch = 0 : i64, scratch_operands = 0 : i64, tpu.core_type = #tpu.core_type<tc>} {
    %c0 = arith.constant 0 : index
    %c0_0 = arith.constant 0 : index
    %0 = vector.load %arg4[%c0, %c0_0] : memref<64x64xbf16, #tpu.memory_space<vmem>>, vector<64x64xbf16>
    %c0_1 = arith.constant 0 : index
    %c0_2 = arith.constant 0 : index
    %1 = vector.load %arg3[%c0_1, %c0_2] : memref<64x1xf32, #tpu.memory_space<vmem>>, vector<64x1xf32>
    %c0_3 = arith.constant 0 : index
    %c0_4 = arith.constant 0 : index
    %2 = vector.load %arg2[%c0_3, %c0_4] : memref<64x32xbf16, #tpu.memory_space<vmem>>, vector<64x32xbf16>
    %c0_5 = arith.constant 0 : index
    %c0_6 = arith.constant 0 : index
    %c0_7 = arith.constant 0 : index
    %3 = vector.load %arg5[%c0_5, %c0_6, %c0_7] : memref<2x32x32xbf16, #tpu.memory_space<vmem>>, vector<1x32x32xbf16>
    %4 = vector.shape_cast %3 : vector<1x32x32xbf16> to vector<32x32xbf16>
    %c0_8 = arith.constant 0 : index
    %c0_9 = arith.constant 0 : index
    %c0_10 = arith.constant 0 : index
    %5 = vector.load %arg6[%c0_8, %c0_9, %c0_10] : memref<2x1x32xf32, #tpu.memory_space<vmem>>, vector<1x1x32xf32>
    %6 = vector.shape_cast %5 : vector<1x1x32xf32> to vector<1x32xf32>
    %c0_11 = arith.constant 0 : index
    %7 = memref.load %arg0[%c0_11] : memref<3xf32, #tpu.memory_space<smem>>
    %cst = arith.constant dense<0.000000e+00> : vector<64x32xf32>
    %8 = tpu.matmul %2, %4, %cst {dimension_numbers = #tpu.dot_dimension_numbers<[1], [0], [0], [1], [0, 0, 1, 1], [], []>} : vector<64x32xbf16>, vector<32x32xbf16>, vector<64x32xf32> -> vector<64x32xf32>
    %9 = arith.truncf %8 : vector<64x32xf32> to vector<64x32xbf16>
    %cst_12 = arith.constant dense<0.000000e+00> : vector<64x32xf32>
    %10 = tpu.matmul %0, %9, %cst_12 {dimension_numbers = #tpu.dot_dimension_numbers<[1], [0], [0], [1], [0, 0, 1, 1], [], []>} : vector<64x64xbf16>, vector<64x32xbf16>, vector<64x32xf32> -> vector<64x32xf32>
    %11 = vector.broadcast %6 : vector<1x32xf32> to vector<64x32xf32>
    %12 = arith.addf %10, %11 : vector<64x32xf32>
    %cst_13 = arith.constant 0.000000e+00 : f32
    %13 = vector.broadcast %cst_13 : f32 to vector<64x32xf32>
    %14 = arith.cmpf oge, %12, %13 : vector<64x32xf32>
    %15 = vector.broadcast %7 : f32 to vector<64x32xf32>
    %16 = arith.mulf %15, %12 : vector<64x32xf32>
    %17 = arith.select %14, %12, %16 : vector<64x32xi1>, vector<64x32xf32>
    %18 = arith.truncf %17 : vector<64x32xf32> to vector<64x32xbf16>
    %c1 = arith.constant 1 : index
    %c0_14 = arith.constant 0 : index
    %c0_15 = arith.constant 0 : index
    %19 = vector.load %arg5[%c1, %c0_14, %c0_15] : memref<2x32x32xbf16, #tpu.memory_space<vmem>>, vector<1x32x32xbf16>
    %20 = vector.shape_cast %19 : vector<1x32x32xbf16> to vector<32x32xbf16>
    %c1_16 = arith.constant 1 : index
    %c0_17 = arith.constant 0 : index
    %c0_18 = arith.constant 0 : index
    %21 = vector.load %arg6[%c1_16, %c0_17, %c0_18] : memref<2x1x32xf32, #tpu.memory_space<vmem>>, vector<1x1x32xf32>
    %22 = vector.shape_cast %21 : vector<1x1x32xf32> to vector<1x32xf32>
    %c1_19 = arith.constant 1 : index
    %23 = memref.load %arg0[%c1_19] : memref<3xf32, #tpu.memory_space<smem>>
    %cst_20 = arith.constant dense<0.000000e+00> : vector<64x32xf32>
    %24 = tpu.matmul %18, %20, %cst_20 {dimension_numbers = #tpu.dot_dimension_numbers<[1], [0], [0], [1], [0, 0, 1, 1], [], []>} : vector<64x32xbf16>, vector<32x32xbf16>, vector<64x32xf32> -> vector<64x32xf32>
    %25 = arith.truncf %24 : vector<64x32xf32> to vector<64x32xbf16>
    %cst_21 = arith.constant dense<0.000000e+00> : vector<64x32xf32>
    %26 = tpu.matmul %0, %25, %cst_21 {dimension_numbers = #tpu.dot_dimension_numbers<[1], [0], [0], [1], [0, 0, 1, 1], [], []>} : vector<64x64xbf16>, vector<64x32xbf16>, vector<64x32xf32> -> vector<64x32xf32>
    %27 = vector.broadcast %22 : vector<1x32xf32> to vector<64x32xf32>
    %28 = arith.addf %26, %27 : vector<64x32xf32>
    %cst_22 = arith.constant 0.000000e+00 : f32
    %29 = vector.broadcast %cst_22 : f32 to vector<64x32xf32>
    %30 = arith.cmpf oge, %28, %29 : vector<64x32xf32>
    %31 = vector.broadcast %23 : f32 to vector<64x32xf32>
    %32 = arith.mulf %31, %28 : vector<64x32xf32>
    %33 = arith.select %30, %28, %32 : vector<64x32xi1>, vector<64x32xf32>
    %34 = arith.truncf %33 : vector<64x32xf32> to vector<64x32xbf16>
    %c0_23 = arith.constant 0 : index
    %c0_24 = arith.constant 0 : index
    %35 = vector.load %arg7[%c0_23, %c0_24] : memref<32x32xbf16, #tpu.memory_space<vmem>>, vector<32x32xbf16>
    %cst_25 = arith.constant dense<0.000000e+00> : vector<64x32xf32>
    %36 = tpu.matmul %34, %35, %cst_25 {dimension_numbers = #tpu.dot_dimension_numbers<[1], [0], [0], [1], [0, 0, 1, 1], [], []>} : vector<64x32xbf16>, vector<32x32xbf16>, vector<64x32xf32> -> vector<64x32xf32>
    %cst_26 = arith.constant 1.000000e+00 : f32
    %37 = vector.broadcast %cst_26 : f32 to vector<64x1xf32>
    %38 = arith.subf %37, %1 : vector<64x1xf32>
    %39 = vector.broadcast %38 : vector<64x1xf32> to vector<64x32xf32>
    %40 = arith.mulf %36, %39 : vector<64x32xf32>
    %41 = arith.truncf %40 : vector<64x32xf32> to vector<64x32xbf16>
    %c0_27 = arith.constant 0 : index
    %c0_28 = arith.constant 0 : index
    %42 = vector.load %arg8[%c0_27, %c0_28] : memref<32x16xbf16, #tpu.memory_space<vmem>>, vector<32x16xbf16>
    %cst_29 = arith.constant dense<0.000000e+00> : vector<64x16xf32>
    %43 = tpu.matmul %41, %42, %cst_29 {dimension_numbers = #tpu.dot_dimension_numbers<[1], [0], [0], [1], [0, 0, 1, 1], [], []>} : vector<64x32xbf16>, vector<32x16xbf16>, vector<64x16xf32> -> vector<64x16xf32>
    %44 = arith.truncf %43 : vector<64x16xf32> to vector<64x16xbf16>
    %cst_30 = arith.constant dense<0.000000e+00> : vector<64x16xf32>
    %45 = tpu.matmul %0, %44, %cst_30 {dimension_numbers = #tpu.dot_dimension_numbers<[1], [0], [0], [1], [0, 0, 1, 1], [], []>} : vector<64x64xbf16>, vector<64x16xbf16>, vector<64x16xf32> -> vector<64x16xf32>
    %c0_31 = arith.constant 0 : index
    %c0_32 = arith.constant 0 : index
    %46 = vector.load %arg9[%c0_31, %c0_32] : memref<1x16xf32, #tpu.memory_space<vmem>>, vector<1x16xf32>
    %47 = vector.broadcast %46 : vector<1x16xf32> to vector<64x16xf32>
    %48 = arith.addf %45, %47 : vector<64x16xf32>
    %c0_33 = arith.constant 0 : index
    %c0_34 = arith.constant 0 : index
    %49 = vector.load %arg1[%c0_33, %c0_34] : memref<64x16xf32, #tpu.memory_space<vmem>>, vector<64x16xf32>
    %50 = arith.mulf %49, %49 : vector<64x16xf32>
    %cst_35 = arith.constant dense<0.000000e+00> : vector<64xf32>
    %51 = vector.multi_reduction <add>, %50, %cst_35 [1] : vector<64x16xf32> to vector<64xf32>
    %52 = vector.shape_cast %51 : vector<64xf32> to vector<64x1xf32>
    %cst_36 = arith.constant 9.99999996E-13 : f32
    %53 = vector.broadcast %cst_36 : f32 to vector<64x1xf32>
    %54 = arith.maximumf %52, %53 : vector<64x1xf32>
    %55 = math.rsqrt %54 : vector<64x1xf32>
    %56 = vector.broadcast %55 : vector<64x1xf32> to vector<64x16xf32>
    %57 = arith.mulf %49, %56 : vector<64x16xf32>
    %58 = arith.mulf %48, %48 : vector<64x16xf32>
    %cst_37 = arith.constant dense<0.000000e+00> : vector<64xf32>
    %59 = vector.multi_reduction <add>, %58, %cst_37 [1] : vector<64x16xf32> to vector<64xf32>
    %60 = vector.shape_cast %59 : vector<64xf32> to vector<64x1xf32>
    %cst_38 = arith.constant 9.99999996E-13 : f32
    %61 = vector.broadcast %cst_38 : f32 to vector<64x1xf32>
    %62 = arith.maximumf %60, %61 : vector<64x1xf32>
    %63 = math.rsqrt %62 : vector<64x1xf32>
    %64 = vector.broadcast %63 : vector<64x1xf32> to vector<64x16xf32>
    %65 = arith.mulf %48, %64 : vector<64x16xf32>
    %66 = arith.mulf %57, %65 : vector<64x16xf32>
    %cst_39 = arith.constant dense<0.000000e+00> : vector<64xf32>
    %67 = vector.multi_reduction <add>, %66, %cst_39 [1] : vector<64x16xf32> to vector<64xf32>
    %68 = vector.shape_cast %67 : vector<64xf32> to vector<64x1xf32>
    %cst_40 = arith.constant 1.000000e+00 : f32
    %69 = vector.broadcast %cst_40 : f32 to vector<64x1xf32>
    %70 = arith.subf %69, %68 : vector<64x1xf32>
    %cst_41 = arith.constant 0.000000e+00 : f32
    %71 = vector.broadcast %cst_41 : f32 to vector<64x1xf32>
    %72 = arith.maximumf %70, %71 : vector<64x1xf32>
    %73 = arith.mulf %72, %72 : vector<64x1xf32>
    %c2 = arith.constant 2 : index
    %74 = memref.load %arg0[%c2] : memref<3xf32, #tpu.memory_space<smem>>
    %75 = arith.mulf %73, %1 : vector<64x1xf32>
    %76 = vector.shape_cast %75 : vector<64x1xf32> to vector<1x64x1xf32>
    %cst_42 = arith.constant dense<0.000000e+00> : vector<1xf32>
    %77 = vector.multi_reduction <add>, %76, %cst_42 [1, 2] : vector<1x64x1xf32> to vector<1xf32>
    %78 = vector.shape_cast %77 : vector<1xf32> to vector<1x1x1xf32>
    %79 = vector.extract %78[0, 0, 0] : f32 from vector<1x1x1xf32>
    %80 = vector.broadcast %79 : f32 to vector<1x1xf32>
    %81 = vector.broadcast %74 : f32 to vector<1x1xf32>
    %82 = arith.mulf %80, %81 : vector<1x1xf32>
    %c0_43 = arith.constant 0 : index
    %c0_44 = arith.constant 0 : index
    %83 = vector.load %arg10[%c0_43, %c0_44] : memref<1x1xf32, #tpu.memory_space<vmem>>, vector<1x1xf32>
    tpu.vector_store %arg10[%c0_43, %c0_44], %82 {strides = array<i32>} : memref<1x1xf32, #tpu.memory_space<vmem>>, vector<1x1xf32>,
    return
  }
}

</mosaic_0001>

<llo_original>
// kernel: tpu_custom_call.1
$region0: #{tpu_custom_call.1}
  #allocation0 [shape = 'u32[]', space=smem, size = 0x4, offset = 0x4, fixed_abs, tag = 'smem constant byte address 0x4 - core index']
  #allocation1 [shape = 'u32[72,128]{1,0:T(1,128)}', space=vmem, size = 0x9000, scoped, tag = 'internal scratch']
  %s0 = inlined_call_operand.vmem [shape: f32[3], index: 0, kind: input, shape index: {}]
  %s1 = inlined_call_operand.vmem [shape: f32[64,16], index: 1, kind: input, shape index: {}]
  %s2 = inlined_call_operand.vmem [shape: bf16[64,32], index: 2, kind: input, shape index: {}]
  %s3 = inlined_call_operand.vmem [shape: f32[64,1], index: 3, kind: input, shape index: {}]
  %s4 = inlined_call_operand.vmem [shape: bf16[64,64], index: 4, kind: input, shape index: {}]
  %s5 = inlined_call_operand.vmem [shape: bf16[2,32,32], index: 5, kind: input, shape index: {}]
  %s6 = inlined_call_operand.vmem [shape: f32[2,1,32], index: 6, kind: input, shape index: {}]
  %s7 = inlined_call_operand.vmem [shape: bf16[32,32], index: 7, kind: input, shape index: {}]
  %s8 = inlined_call_operand.vmem [shape: bf16[32,16], index: 8, kind: input, shape index: {}]
  %s9 = inlined_call_operand.vmem [shape: f32[1,16], index: 9, kind: input, shape index: {}]
  %s10 = inlined_call_operand.hbm [shape: f32[1,1], index: 10, kind: output, shape index: {}]
  %s11 = sld [smem:[#allocation0]]
  $region54: #{tpu_custom_call.1} parent=0
    _
  %s13 = ssub.s32 1, %s11
  %s14 = scalar_select 0, %s13, %s11
  $region1: #{tpu_custom_call.1} parent=0
    #allocation2 [shape = 'u8[512]{0}', space=smem, size = 0x200, scoped, tag = 'input window, operand 0, single buffered']
    #allocation3 [shape = 's32[1]{0}', space=sflag, size = 0x4, scoped, tag = 'scoped memory for tpu_custom_call.1']
    #allocation4 [shape = 's32[1]{0}', space=sflag, size = 0x4, scoped, tag = 'scoped memory for tpu_custom_call.1']
    #allocation5 [shape = 'u8[512]{0}', space=vmem, size = 0x400, scoped, tag = 'output window, operand 0, single buffered']
    %15 = vsyncpa [#allocation4], 0
    %16 = vsyncpa [#allocation3], 0
    // Predicated region
    $region2: #{tpu_custom_call.1} parent=1 // pred_check
      _
    $region3: #{tpu_custom_call.1} parent=1 // pred_check_branch
      %18 = sbr.rel (0) target = $region5
    $region4: #{tpu_custom_call.1} parent=1 // pred_region
      %20 = vsyncadd [#allocation4], 0
      %s22 = sshll.u32 %s0, 4
      %s23 = int_to_ptr.vmem [resolvable:$true] %s22
      %25 = dma.vmem_to_smem %s23, 16, [#allocation2], [#allocation4]
    $region5: #{tpu_custom_call.1} parent=1 // pred_fallthru
      _
    // Predicated region
    $region6: #{tpu_custom_call.1} parent=1 // pred_check
      _
    $region7: #{tpu_custom_call.1} parent=1 // pred_check_branch
      %27 = sbr.rel (0) target = $region9
    $region8: #{tpu_custom_call.1} parent=1 // pred_region
      _
    $region9: #{tpu_custom_call.1} parent=1 // pred_fallthru
      _
    // Predicated region
    $region10: #{tpu_custom_call.1} parent=1 // pred_check
      _
    $region11: #{tpu_custom_call.1} parent=1 // pred_check_branch
      %29 = sbr.rel (0) target = $region13
    $region12: #{tpu_custom_call.1} parent=1 // pred_region
      _
    $region13: #{tpu_custom_call.1} parent=1 // pred_fallthru
      _
    // Predicated region
    $region14: #{tpu_custom_call.1} parent=1 // pred_check
      _
    $region15: #{tpu_custom_call.1} parent=1 // pred_check_branch
      %31 = sbr.rel (0) target = $region17
    $region16: #{tpu_custom_call.1} parent=1 // pred_region
      _
    $region17: #{tpu_custom_call.1} parent=1 // pred_fallthru
      _
    // Predicated region
    $region18: #{tpu_custom_call.1} parent=1 // pred_check
      _
    $region19: #{tpu_custom_call.1} parent=1 // pred_check_branch
      %33 = sbr.rel (0) target = $region21
    $region20: #{tpu_custom_call.1} parent=1 // pred_region
      _
    $region21: #{tpu_custom_call.1} parent=1 // pred_fallthru
      _
    // Predicated region
    $region22: #{tpu_custom_call.1} parent=1 // pred_check
      _
    $region23: #{tpu_custom_call.1} parent=1 // pred_check_branch
      %35 = sbr.rel (0) target = $region25
    $region24: #{tpu_custom_call.1} parent=1 // pred_region
      _
    $region25: #{tpu_custom_call.1} parent=1 // pred_fallthru
      _
    // Predicated region
    $region26: #{tpu_custom_call.1} parent=1 // pred_check
      _
    $region27: #{tpu_custom_call.1} parent=1 // pred_check_branch
      %37 = sbr.rel (0) target = $region29
    $region28: #{tpu_custom_call.1} parent=1 // pred_region
      _
    $region29: #{tpu_custom_call.1} parent=1 // pred_fallthru
      _
    // Predicated region
    $region30: #{tpu_custom_call.1} parent=1 // pred_check
      _
    $region31: #{tpu_custom_call.1} parent=1 // pred_check_branch
      %39 = sbr.rel (0) target = $region33
    $region32: #{tpu_custom_call.1} parent=1 // pred_region
      _
    $region33: #{tpu_custom_call.1} parent=1 // pred_fallthru
      _
    // Predicated region
    $region34: #{tpu_custom_call.1} parent=1 // pred_check
      _
    $region35: #{tpu_custom_call.1} parent=1 // pred_check_branch
      %41 = sbr.rel (0) target = $region37
    $region36: #{tpu_custom_call.1} parent=1 // pred_region
      _
    $region37: #{tpu_custom_call.1} parent=1 // pred_fallthru
      _
    // Predicated region
    $region38: #{tpu_custom_call.1} parent=1 // pred_check
      _
    $region39: #{tpu_custom_call.1} parent=1 // pred_check_branch
      %43 = sbr.rel (0) target = $region41
    $region40: #{tpu_custom_call.1} parent=1 // pred_region
      _
    $region41: #{tpu_custom_call.1} parent=1 // pred_fallthru
      _
    // Predicated region
    $region42: #{tpu_custom_call.1} parent=1 // pred_check
      _
    $region43: #{tpu_custom_call.1} parent=1 // pred_check_branch
      %45 = sbr.rel (0) target = $region45
    $region44: #{tpu_custom_call.1} parent=1 // pred_region
      %47 = dma.done [#allocation4], 16
    $region45: #{tpu_custom_call.1} parent=1 // pred_fallthru
      _
    %48 = sfence
    %v50 = vld [vmem:[%s4] sm:$0xf]
    %v51 = vld [vmem:[%s4 + $0x4] sm:$0xf]
    %v52 = vld [vmem:[%s4 + $0x8] sm:$0xf]
    %v53 = vld [vmem:[%s4 + $0xc] sm:$0xf]
    %v54 = vld [vmem:[%s4 + $0x10] sm:$0xf]
    %v55 = vld [vmem:[%s4 + $0x14] sm:$0xf]
    %v56 = vld [vmem:[%s4 + $0x18] sm:$0xf]
    %v57 = vld [vmem:[%s4 + $0x1c] sm:$0xf]
    %v58 = vld [vmem:[%s3] sm:$0xff]
    %v59 = vld [vmem:[%s3 + $0x8] sm:$0xff]
    %v60 = vld [vmem:[%s3 + $0x10] sm:$0xff]
    %v61 = vld [vmem:[%s3 + $0x18] sm:$0xff]
    %v62 = vld [vmem:[%s3 + $0x20] sm:$0xff]
    %v63 = vld [vmem:[%s3 + $0x28] sm:$0xff]
    %v64 = vld [vmem:[%s3 + $0x30] sm:$0xff]
    %v65 = vld [vmem:[%s3 + $0x38] sm:$0xff]
    %v66 = vld [vmem:[%s2] sm:$0xf]
    %v67 = vld [vmem:[%s2 + $0x4] sm:$0xf]
    %v68 = vld [vmem:[%s2 + $0x8] sm:$0xf]
    %v69 = vld [vmem:[%s2 + $0xc] sm:$0xf]
    %v70 = vld [vmem:[%s2 + $0x10] sm:$0xf]
    %v71 = vld [vmem:[%s2 + $0x14] sm:$0xf]
    %v72 = vld [vmem:[%s2 + $0x18] sm:$0xf]
    %v73 = vld [vmem:[%s2 + $0x1c] sm:$0xf]
    %v74 = vld [vmem:[%s5] sm:$0xf]
    %v75 = vld [vmem:[%s5 + $0x4] sm:$0xf]
    %v76 = vld [vmem:[%s5 + $0x8] sm:$0xf]
    %v77 = vld [vmem:[%s5 + $0xc] sm:$0xf]
    %v78 = vld [vmem:[%s6] sm:$0x1]
    %s79 = sld [smem:[#allocation2]]
    %v88 = vunpack.c.l.b16 %v66
    %v89 = vunpack.c.l.b16 %v67
    %v90 = vunpack.c.l.b16 %v68
    %v91 = vunpack.c.l.b16 %v69
    %v92 = vunpack.c.l.b16 %v70
    %v93 = vunpack.c.l.b16 %v71
    %v94 = vunpack.c.l.b16 %v72
    %v95 = vunpack.c.l.b16 %v73
    %v96 = vpack.c.b16 %v89, %v88
    %v97 = vpack.c.b16 %v91, %v90
    %v98 = vpack.c.b16 %v93, %v92
    %v99 = vpack.c.b16 %v95, %v94
    %v104 = vunpack.c.l.b16 %v74
    %v105 = vunpack.c.l.b16 %v75
    %v106 = vunpack.c.l.b16 %v76
    %v107 = vunpack.c.l.b16 %v77
    %v108 = vpack.c.b16 %v105, %v104
    %v109 = vpack.c.b16 %v107, %v106
    %vm112 = vcmask 261120
    %v114 = vsel %vm112, %v96, 0
    %v117 = vsel %vm112, %v97, 0
    %v120 = vsel %vm112, %v98, 0
    %v123 = vsel %vm112, %v99, 0
    %125 = vmatpush.bf16.msra.mxu0 0
    %126 = vmatpush.bf16.msra.mxu0 0
    %127 = vmatpush.bf16.msra.mxu0 0
    %128 = vmatpush.bf16.msra.mxu0 0
    %129 = vmatpush.bf16.msra.mxu0 0
    %130 = vmatpush.bf16.msra.mxu0 0
    %131 = vmatpush.bf16.msra.mxu0 %v109
    %132 = vmatpush.bf16.msra.mxu0 %v108
    %133 = vmatmul.bf16.gmra.mxu0 %v114
    %v134 = vpop.f32.mrf.mxu0
    %v135 = vadd.f32 0.0, %v134
    %v136 = vpop.f32.mrf.mxu0
    %v137 = vadd.f32 0.0, %v136
    %138 = vmatmul.bf16.gmra.mxu0 %v117
    %v139 = vpop.f32.mrf.mxu0
    %v140 = vadd.f32 0.0, %v139
    %v141 = vpop.f32.mrf.mxu0
    %v142 = vadd.f32 0.0, %v141
    %143 = vmatmul.bf16.gmra.mxu0 %v120
    %v144 = vpop.f32.mrf.mxu0
    %v145 = vadd.f32 0.0, %v144
    %v146 = vpop.f32.mrf.mxu0
    %v147 = vadd.f32 0.0, %v146
    %148 = vmatmul.bf16.gmra.mxu0 %v123
    %v149 = vpop.f32.mrf.mxu0
    %v150 = vadd.f32 0.0, %v149
    %v151 = vpop.f32.mrf.mxu0
    %v152 = vadd.f32 0.0, %v151
    %153 = vdwg.mxu0
    %v154 = vpack.c.bf16 %v137, %v135
    %v155 = vpack.c.bf16 %v142, %v140
    %v156 = vpack.c.bf16 %v147, %v145
    %v157 = vpack.c.bf16 %v152, %v150
    %v159 = vperm.slane %v78, 0
    %v169 = vunpack.c.l.b16 %v50
    %v170 = vunpack.c.l.b16 %v51
    %v171 = vunpack.c.l.b16 %v52
    %v172 = vunpack.c.l.b16 %v53
    %v173 = vunpack.c.l.b16 %v54
    %v174 = vunpack.c.l.b16 %v55
    %v175 = vunpack.c.l.b16 %v56
    %v176 = vunpack.c.l.b16 %v57
    %v177 = vpack.c.b16 %v170, %v169
    %v178 = vpack.c.b16 %v172, %v171
    %v179 = vpack.c.b16 %v174, %v173
    %v180 = vpack.c.b16 %v176, %v175
    %vm181 = vcmask 523264
    %v183 = vsel %vm181, %v177, 0
    %v186 = vsel %vm181, %v178, 0
    %v189 = vsel %vm181, %v179, 0
    %v192 = vsel %vm181, %v180, 0
    %194 = vmatpush.bf16.msra.mxu0 0
    %195 = vmatpush.bf16.msra.mxu0 0
    %196 = vmatpush.bf16.msra.mxu0 0
    %197 = vmatpush.bf16.msra.mxu0 0
    %198 = vmatpush.bf16.msra.mxu0 %v157
    %199 = vmatpush.bf16.msra.mxu0 %v156
    %200 = vmatpush.bf16.msra.mxu0 %v155
    %201 = vmatpush.bf16.msra.mxu0 %v154
    %202 = vmatmul.bf16.gmra.mxu0 %v183
    %v203 = vpop.f32.mrf.mxu0
    %v204 = vadd.f32 %v159, %v203
    %v205 = vpop.f32.mrf.mxu0
    %v206 = vadd.f32 %v159, %v205
    %207 = vmatmul.bf16.gmra.mxu0 %v186
    %v208 = vpop.f32.mrf.mxu0
    %v209 = vadd.f32 %v159, %v208
    %v210 = vpop.f32.mrf.mxu0
    %v211 = vadd.f32 %v159, %v210
    %212 = vmatmul.bf16.gmra.mxu0 %v189
    %v213 = vpop.f32.mrf.mxu0
    %v214 = vadd.f32 %v159, %v213
    %v215 = vpop.f32.mrf.mxu0
    %v216 = vadd.f32 %v159, %v215
    %217 = vmatmul.bf16.gmra.mxu0 %v192
    %v218 = vpop.f32.mrf.mxu0
    %v219 = vadd.f32 %v159, %v218
    %v220 = vpop.f32.mrf.mxu0
    %v221 = vadd.f32 %v159, %v220
    %222 = vdwg.mxu0
    %vm223 = vcmp.ge.f32.partialorder %v204, 0.0
    %vm224 = vcmp.ge.f32.partialorder %v206, 0.0
    %vm225 = vcmp.ge.f32.partialorder %v209, 0.0
    %vm226 = vcmp.ge.f32.partialorder %v211, 0.0
    %vm227 = vcmp.ge.f32.partialorder %v214, 0.0
    %vm228 = vcmp.ge.f32.partialorder %v216, 0.0
    %vm229 = vcmp.ge.f32.partialorder %v219, 0.0
    %vm230 = vcmp.ge.f32.partialorder %v221, 0.0
    %v231 = vstv %s79
    %v232 = vmul.f32 %v231, %v204
    %v233 = vmul.f32 %v231, %v206
    %v234 = vmul.f32 %v231, %v209
    %v235 = vmul.f32 %v231, %v211
    %v236 = vmul.f32 %v231, %v214
    %v237 = vmul.f32 %v231, %v216
    %v238 = vmul.f32 %v231, %v219
    %v239 = vmul.f32 %v231, %v221
    %v240 = vsel %vm223, %v204, %v232
    %v241 = vsel %vm224, %v206, %v233
    %v242 = vsel %vm225, %v209, %v234
    %v243 = vsel %vm226, %v211, %v235
    %v244 = vsel %vm227, %v214, %v236
    %v245 = vsel %vm228, %v216, %v237
    %v246 = vsel %vm229, %v219, %v238
    %v247 = vsel %vm230, %v221, %v239
    %v248 = vpack.c.bf16 %v241, %v240
    %v249 = vpack.c.bf16 %v243, %v242
    %v250 = vpack.c.bf16 %v245, %v244
    %v251 = vpack.c.bf16 %v247, %v246
    %s252 = scalar_lea.vmem %s5, 16
    %v253 = vld [vmem:[%s252] sm:$0xf]
    %v254 = vld [vmem:[%s252 + $0x4] sm:$0xf]
    %v255 = vld [vmem:[%s252 + $0x8] sm:$0xf]
    %v256 = vld [vmem:[%s252 + $0xc] sm:$0xf]
    %s257 = scalar_lea.vmem %s6, 1
    %v258 = vld [vmem:[%s257] sm:$0x1]
    %s259 = sld [smem:[#allocation2 + $0x1]]
    %v264 = vunpack.c.l.b16 %v253
    %v265 = vunpack.c.l.b16 %v254
    %v266 = vunpack.c.l.b16 %v255
    %v267 = vunpack.c.l.b16 %v256
    %v268 = vpack.c.b16 %v265, %v264
    %v269 = vpack.c.b16 %v267, %v266
    %v273 = vsel %vm112, %v248, 0
    %v276 = vsel %vm112, %v249, 0
    %v279 = vsel %vm112, %v250, 0
    %v282 = vsel %vm112, %v251, 0
    %284 = vmatpush.bf16.msra.mxu0 0
    %285 = vmatpush.bf16.msra.mxu0 0
    %286 = vmatpush.bf16.msra.mxu0 0
    %287 = vmatpush.bf16.msra.mxu0 0
    %288 = vmatpush.bf16.msra.mxu0 0
    %289 = vmatpush.bf16.msra.mxu0 0
    %290 = vmatpush.bf16.msra.mxu0 %v269
    %291 = vmatpush.bf16.msra.mxu0 %v268
    %292 = vmatmul.bf16.gmra.mxu0 %v273
    %v293 = vpop.f32.mrf.mxu0
    %v294 = vadd.f32 0.0, %v293
    %v295 = vpop.f32.mrf.mxu0
    %v296 = vadd.f32 0.0, %v295
    %297 = vmatmul.bf16.gmra.mxu0 %v276
    %v298 = vpop.f32.mrf.mxu0
    %v299 = vadd.f32 0.0, %v298
    %v300 = vpop.f32.mrf.mxu0
    %v301 = vadd.f32 0.0, %v300
    %302 = vmatmul.bf16.gmra.mxu0 %v279
    %v303 = vpop.f32.mrf.mxu0
    %v304 = vadd.f32 0.0, %v303
    %v305 = vpop.f32.mrf.mxu0
    %v306 = vadd.f32 0.0, %v305
    %307 = vmatmul.bf16.gmra.mxu0 %v282
    %v308 = vpop.f32.mrf.mxu0
    %v309 = vadd.f32 0.0, %v308
    %v310 = vpop.f32.mrf.mxu0
    %v311 = vadd.f32 0.0, %v310
    %312 = vdwg.mxu0
    %v313 = vpack.c.bf16 %v296, %v294
    %v314 = vpack.c.bf16 %v301, %v299
    %v315 = vpack.c.bf16 %v306, %v304
    %v316 = vpack.c.bf16 %v311, %v309
    %v318 = vperm.slane %v258, 0
    %320 = vmatpush.bf16.msra.mxu0 0
    %321 = vmatpush.bf16.msra.mxu0 0
    %322 = vmatpush.bf16.msra.mxu0 0
    %323 = vmatpush.bf16.msra.mxu0 0
    %324 = vmatpush.bf16.msra.mxu0 %v316
    %325 = vmatpush.bf16.msra.mxu0 %v315
    %326 = vmatpush.bf16.msra.mxu0 %v314
    %327 = vmatpush.bf16.msra.mxu0 %v313
    %328 = vmatmul.bf16.gmra.mxu0 %v183
    %v329 = vpop.f32.mrf.mxu0
    %v330 = vadd.f32 %v318, %v329
    %v331 = vpop.f32.mrf.mxu0
    %v332 = vadd.f32 %v318, %v331
    %333 = vmatmul.bf16.gmra.mxu0 %v186
    %v334 = vpop.f32.mrf.mxu0
    %v335 = vadd.f32 %v318, %v334
    %v336 = vpop.f32.mrf.mxu0
    %v337 = vadd.f32 %v318, %v336
    %338 = vmatmul.bf16.gmra.mxu0 %v189
    %v339 = vpop.f32.mrf.mxu0
    %v340 = vadd.f32 %v318, %v339
    %v341 = vpop.f32.mrf.mxu0
    %v342 = vadd.f32 %v318, %v341
    %343 = vmatmul.bf16.gmra.mxu0 %v192
    %v344 = vpop.f32.mrf.mxu0
    %v345 = vadd.f32 %v318, %v344
    %v346 = vpop.f32.mrf.mxu0
    %v347 = vadd.f32 %v318, %v346
    %348 = vdwg.mxu0
    %vm349 = vcmp.ge.f32.partialorder %v330, 0.0
    %vm350 = vcmp.ge.f32.partialorder %v332, 0.0
    %vm351 = vcmp.ge.f32.partialorder %v335, 0.0
    %vm352 = vcmp.ge.f32.partialorder %v337, 0.0
    %vm353 = vcmp.ge.f32.partialorder %v340, 0.0
    %vm354 = vcmp.ge.f32.partialorder %v342, 0.0
    %vm355 = vcmp.ge.f32.partialorder %v345, 0.0
    %vm356 = vcmp.ge.f32.partialorder %v347, 0.0
    %v357 = vstv %s259
    %v358 = vmul.f32 %v357, %v330
    %v359 = vmul.f32 %v357, %v332
    %v360 = vmul.f32 %v357, %v335
    %v361 = vmul.f32 %v357, %v337
    %v362 = vmul.f32 %v357, %v340
    %v363 = vmul.f32 %v357, %v342
    %v364 = vmul.f32 %v357, %v345
    %v365 = vmul.f32 %v357, %v347
    %v366 = vsel %vm349, %v330, %v358
    %v367 = vsel %vm350, %v332, %v359
    %v368 = vsel %vm351, %v335, %v360
    %v369 = vsel %vm352, %v337, %v361
    %v370 = vsel %vm353, %v340, %v362
    %v371 = vsel %vm354, %v342, %v363
    %v372 = vsel %vm355, %v345, %v364
    %v373 = vsel %vm356, %v347, %v365
    %v374 = vpack.c.bf16 %v367, %v366
    %v375 = vpack.c.bf16 %v369, %v368
    %v376 = vpack.c.bf16 %v371, %v370
    %v377 = vpack.c.bf16 %v373, %v372
    %v378 = vld [vmem:[%s7] sm:$0xf]
    %v379 = vld [vmem:[%s7 + $0x4] sm:$0xf]
    %v380 = vld [vmem:[%s7 + $0x8] sm:$0xf]
    %v381 = vld [vmem:[%s7 + $0xc] sm:$0xf]
    %v386 = vunpack.c.l.b16 %v378
    %v387 = vunpack.c.l.b16 %v379
    %v388 = vunpack.c.l.b16 %v380
    %v389 = vunpack.c.l.b16 %v381
    %v390 = vpack.c.b16 %v387, %v386
    %v391 = vpack.c.b16 %v389, %v388
    %v395 = vsel %vm112, %v374, 0
    %v398 = vsel %vm112, %v375, 0
    %v401 = vsel %vm112, %v376, 0
    %v404 = vsel %vm112, %v377, 0
    %406 = vmatpush.bf16.msra.mxu0 0
    %407 = vmatpush.bf16.msra.mxu0 0
    %408 = vmatpush.bf16.msra.mxu0 0
    %409 = vmatpush.bf16.msra.mxu0 0
    %410 = vmatpush.bf16.msra.mxu0 0
    %411 = vmatpush.bf16.msra.mxu0 0
    %412 = vmatpush.bf16.msra.mxu0 %v391
    %413 = vmatpush.bf16.msra.mxu0 %v390
    %414 = vmatmul.bf16.gmra.mxu0 %v395
    %v415 = vpop.f32.mrf.mxu0
    %v416 = vadd.f32 0.0, %v415
    %v417 = vpop.f32.mrf.mxu0
    %v418 = vadd.f32 0.0, %v417
    %419 = vmatmul.bf16.gmra.mxu0 %v398
    %v420 = vpop.f32.mrf.mxu0
    %v421 = vadd.f32 0.0, %v420
    %v422 = vpop.f32.mrf.mxu0
    %v423 = vadd.f32 0.0, %v422
    %424 = vmatmul.bf16.gmra.mxu0 %v401
    %v425 = vpop.f32.mrf.mxu0
    %v426 = vadd.f32 0.0, %v425
    %v427 = vpop.f32.mrf.mxu0
    %v428 = vadd.f32 0.0, %v427
    %429 = vmatmul.bf16.gmra.mxu0 %v404
    %v430 = vpop.f32.mrf.mxu0
    %v431 = vadd.f32 0.0, %v430
    %v432 = vpop.f32.mrf.mxu0
    %v433 = vadd.f32 0.0, %v432
    %434 = vdwg.mxu0
    %v435 = vsub.f32 1.0, %v58
    %v436 = vsub.f32 1.0, %v59
    %v437 = vsub.f32 1.0, %v60
    %v438 = vsub.f32 1.0, %v61
    %v439 = vsub.f32 1.0, %v62
    %v440 = vsub.f32 1.0, %v63
    %v441 = vsub.f32 1.0, %v64
    %v442 = vsub.f32 1.0, %v65
    %444 = vset.pattern.permute.xlu0 0
    %445 = vperm.xlu0 %444, %v435
    %v446 = vpop.permute.xlu0 %445
    %449 = vset.pattern.permute.xlu0 0
    %450 = vperm.xlu0 %449, %v436
    %v451 = vpop.permute.xlu0 %450
    %454 = vset.pattern.permute.xlu0 0
    %455 = vperm.xlu0 %454, %v437
    %v456 = vpop.permute.xlu0 %455
    %459 = vset.pattern.permute.xlu0 0
    %460 = vperm.xlu0 %459, %v438
    %v461 = vpop.permute.xlu0 %460
    %464 = vset.pattern.permute.xlu0 0
    %465 = vperm.xlu0 %464, %v439
    %v466 = vpop.permute.xlu0 %465
    %469 = vset.pattern.permute.xlu0 0
    %470 = vperm.xlu0 %469, %v440
    %v471 = vpop.permute.xlu0 %470
    %474 = vset.pattern.permute.xlu0 0
    %475 = vperm.xlu0 %474, %v441
    %v476 = vpop.permute.xlu0 %475
    %479 = vset.pattern.permute.xlu0 0
    %480 = vperm.xlu0 %479, %v442
    %v481 = vpop.permute.xlu0 %480
    %v483 = vmul.f32 %v416, %v446
    %v484 = vmul.f32 %v418, %v451
    %v485 = vmul.f32 %v421, %v456
    %v486 = vmul.f32 %v423, %v461
    %v487 = vmul.f32 %v426, %v466
    %v488 = vmul.f32 %v428, %v471
    %v489 = vmul.f32 %v431, %v476
    %v490 = vmul.f32 %v433, %v481
    %v491 = vpack.c.bf16 %v484, %v483
    %v492 = vpack.c.bf16 %v486, %v485
    %v493 = vpack.c.bf16 %v488, %v487
    %v494 = vpack.c.bf16 %v490, %v489
    %v495 = vld [vmem:[%s8] sm:$0xf]
    %v496 = vld [vmem:[%s8 + $0x4] sm:$0xf]
    %v497 = vld [vmem:[%s8 + $0x8] sm:$0xf]
    %v498 = vld [vmem:[%s8 + $0xc] sm:$0xf]
    %v503 = vunpack.c.l.b16 %v495
    %v504 = vunpack.c.l.b16 %v496
    %v505 = vunpack.c.l.b16 %v497
    %v506 = vunpack.c.l.b16 %v498
    %v507 = vpack.c.b16 %v504, %v503
    %v508 = vpack.c.b16 %v506, %v505
    %v512 = vsel %vm112, %v491, 0
    %v515 = vsel %vm112, %v492, 0
    %v518 = vsel %vm112, %v493, 0
    %v521 = vsel %vm112, %v494, 0
    %523 = vmatpush.bf16.msra.mxu0 0
    %524 = vmatpush.bf16.msra.mxu0 0
    %525 = vmatpush.bf16.msra.mxu0 0
    %526 = vmatpush.bf16.msra.mxu0 0
    %527 = vmatpush.bf16.msra.mxu0 0
    %528 = vmatpush.bf16.msra.mxu0 0
    %529 = vmatpush.bf16.msra.mxu0 %v508
    %530 = vmatpush.bf16.msra.mxu0 %v507
    %531 = vmatmul.bf16.gmra.mxu0 %v512
    %v532 = vpop.f32.mrf.mxu0
    %v533 = vadd.f32 0.0, %v532
    %v534 = vpop.f32.mrf.mxu0
    %v535 = vadd.f32 0.0, %v534
    %536 = vmatmul.bf16.gmra.mxu0 %v515
    %v537 = vpop.f32.mrf.mxu0
    %v538 = vadd.f32 0.0, %v537
    %v539 = vpop.f32.mrf.mxu0
    %v540 = vadd.f32 0.0, %v539
    %541 = vmatmul.bf16.gmra.mxu0 %v518
    %v542 = vpop.f32.mrf.mxu0
    %v543 = vadd.f32 0.0, %v542
    %v544 = vpop.f32.mrf.mxu0
    %v545 = vadd.f32 0.0, %v544
    %546 = vmatmul.bf16.gmra.mxu0 %v521
    %v547 = vpop.f32.mrf.mxu0
    %v548 = vadd.f32 0.0, %v547
    %v549 = vpop.f32.mrf.mxu0
    %v550 = vadd.f32 0.0, %v549
    %551 = vdwg.mxu0
    %v552 = vpack.c.bf16 %v535, %v533
    %v553 = vpack.c.bf16 %v540, %v538
    %v554 = vpack.c.bf16 %v545, %v543
    %v555 = vpack.c.bf16 %v550, %v548
    %v556 = vld [vmem:[%s9] sm:$0x1]
    %v558 = vperm.slane %v556, 0
    %560 = vmatpush.bf16.msra.mxu0 0
    %561 = vmatpush.bf16.msra.mxu0 0
    %562 = vmatpush.bf16.msra.mxu0 0
    %563 = vmatpush.bf16.msra.mxu0 0
    %564 = vmatpush.bf16.msra.mxu0 %v555
    %565 = vmatpush.bf16.msra.mxu0 %v554
    %566 = vmatpush.bf16.msra.mxu0 %v553
    %567 = vmatpush.bf16.msra.mxu0 %v552
    %568 = vmatmul.bf16.gmra.mxu0 %v183
    %v569 = vpop.f32.mrf.mxu0
    %v570 = vadd.f32 %v558, %v569
    %v571 = vpop.f32.mrf.mxu0
    %v572 = vadd.f32 %v558, %v571
    %573 = vmatmul.bf16.gmra.mxu0 %v186
    %v574 = vpop.f32.mrf.mxu0
    %v575 = vadd.f32 %v558, %v574
    %v576 = vpop.f32.mrf.mxu0
    %v577 = vadd.f32 %v558, %v576
    %578 = vmatmul.bf16.gmra.mxu0 %v189
    %v579 = vpop.f32.mrf.mxu0
    %v580 = vadd.f32 %v558, %v579
    %v581 = vpop.f32.mrf.mxu0
    %v582 = vadd.f32 %v558, %v581
    %583 = vmatmul.bf16.gmra.mxu0 %v192
    %v584 = vpop.f32.mrf.mxu0
    %v585 = vadd.f32 %v558, %v584
    %v586 = vpop.f32.mrf.mxu0
    %v587 = vadd.f32 %v558, %v586
    %588 = vdwg.mxu0
    %v589 = vld [vmem:[%s1] sm:$0xff]
    %v590 = vld [vmem:[%s1 + $0x8] sm:$0xff]
    %v591 = vld [vmem:[%s1 + $0x10] sm:$0xff]
    %v592 = vld [vmem:[%s1 + $0x18] sm:$0xff]
    %v593 = vld [vmem:[%s1 + $0x20] sm:$0xff]
    %v594 = vld [vmem:[%s1 + $0x28] sm:$0xff]
    %v595 = vld [vmem:[%s1 + $0x30] sm:$0xff]
    %v596 = vld [vmem:[%s1 + $0x38] sm:$0xff]
    %v597 = vmul.f32 %v589, %v589
    %v598 = vmul.f32 %v590, %v590
    %v599 = vmul.f32 %v591, %v591
    %v600 = vmul.f32 %v592, %v592
    %v601 = vmul.f32 %v593, %v593
    %v602 = vmul.f32 %v594, %v594
    %v603 = vmul.f32 %v595, %v595
    %v604 = vmul.f32 %v596, %v596
    %vm605 = vcmask 130048
    %v606 = vsel %vm605, %v597, 0.0
    %607 = vadd.xlane.f32.xlu0 %v606
    %v608 = vpop.xlane.xlu0 %607
    %v609 = vsel %vm605, %v598, 0.0
    %610 = vadd.xlane.f32.xlu0 %v609
    %v611 = vpop.xlane.xlu0 %610
    %v612 = vsel %vm605, %v599, 0.0
    %613 = vadd.xlane.f32.xlu0 %v612
    %v614 = vpop.xlane.xlu0 %613
    %v615 = vsel %vm605, %v600, 0.0
    %616 = vadd.xlane.f32.xlu0 %v615
    %v617 = vpop.xlane.xlu0 %616
    %v618 = vsel %vm605, %v601, 0.0
    %619 = vadd.xlane.f32.xlu0 %v618
    %v620 = vpop.xlane.xlu0 %619
    %v621 = vsel %vm605, %v602, 0.0
    %622 = vadd.xlane.f32.xlu0 %v621
    %v623 = vpop.xlane.xlu0 %622
    %v624 = vsel %vm605, %v603, 0.0
    %625 = vadd.xlane.f32.xlu0 %v624
    %v626 = vpop.xlane.xlu0 %625
    %v627 = vsel %vm605, %v604, 0.0
    %628 = vadd.xlane.f32.xlu0 %v627
    %v629 = vpop.xlane.xlu0 %628
    %v630 = vmax.f32 %v608, 1e-12
    %v631 = vmax.f32 %v611, 1e-12
    %v632 = vmax.f32 %v614, 1e-12
    %v633 = vmax.f32 %v617, 1e-12
    %v634 = vmax.f32 %v620, 1e-12
    %v635 = vmax.f32 %v623, 1e-12
    %v636 = vmax.f32 %v626, 1e-12
    %v637 = vmax.f32 %v629, 1e-12
    %v638 = vrsqrt.pop %v630
    %v639 = vmul.f32 %v638, %v630
    %v640 = vmul.f32 %v639, %v638
    %v641 = vmul.f32 0.5, %v640
    %v642 = vsub.f32 1.5, %v641
    %v643 = vmul.f32 %v638, %v642
    %vm644 = vweird.f32 %v630
    %vm645 = vweird.f32 %v638
    %vm646 = vmor %vm644, %vm645
    %v647 = vsel %vm646, %v638, %v643
    %v648 = vrsqrt.pop %v631
    %v649 = vmul.f32 %v648, %v631
    %v650 = vmul.f32 %v649, %v648
    %v651 = vmul.f32 0.5, %v650
    %v652 = vsub.f32 1.5, %v651
    %v653 = vmul.f32 %v648, %v652
    %vm654 = vweird.f32 %v631
    %vm655 = vweird.f32 %v648
    %vm656 = vmor %vm654, %vm655
    %v657 = vsel %vm656, %v648, %v653
    %v658 = vrsqrt.pop %v632
    %v659 = vmul.f32 %v658, %v632
    %v660 = vmul.f32 %v659, %v658
    %v661 = vmul.f32 0.5, %v660
    %v662 = vsub.f32 1.5, %v661
    %v663 = vmul.f32 %v658, %v662
    %vm664 = vweird.f32 %v632
    %vm665 = vweird.f32 %v658
    %vm666 = vmor %vm664, %vm665
    %v667 = vsel %vm666, %v658, %v663
    %v668 = vrsqrt.pop %v633
    %v669 = vmul.f32 %v668, %v633
    %v670 = vmul.f32 %v669, %v668
    %v671 = vmul.f32 0.5, %v670
    %v672 = vsub.f32 1.5, %v671
    %v673 = vmul.f32 %v668, %v672
    %vm674 = vweird.f32 %v633
    %vm675 = vweird.f32 %v668
    %vm676 = vmor %vm674, %vm675
    %v677 = vsel %vm676, %v668, %v673
    %v678 = vrsqrt.pop %v634
    %v679 = vmul.f32 %v678, %v634
    %v680 = vmul.f32 %v679, %v678
    %v681 = vmul.f32 0.5, %v680
    %v682 = vsub.f32 1.5, %v681
    %v683 = vmul.f32 %v678, %v682
    %vm684 = vweird.f32 %v634
    %vm685 = vweird.f32 %v678
    %vm686 = vmor %vm684, %vm685
    %v687 = vsel %vm686, %v678, %v683
    %v688 = vrsqrt.pop %v635
    %v689 = vmul.f32 %v688, %v635
    %v690 = vmul.f32 %v689, %v688
    %v691 = vmul.f32 0.5, %v690
    %v692 = vsub.f32 1.5, %v691
    %v693 = vmul.f32 %v688, %v692
    %vm694 = vweird.f32 %v635
    %vm695 = vweird.f32 %v688
    %vm696 = vmor %vm694, %vm695
    %v697 = vsel %vm696, %v688, %v693
    %v698 = vrsqrt.pop %v636
    %v699 = vmul.f32 %v698, %v636
    %v700 = vmul.f32 %v699, %v698
    %v701 = vmul.f32 0.5, %v700
    %v702 = vsub.f32 1.5, %v701
    %v703 = vmul.f32 %v698, %v702
    %vm704 = vweird.f32 %v636
    %vm705 = vweird.f32 %v698
    %vm706 = vmor %vm704, %vm705
    %v707 = vsel %vm706, %v698, %v703
    %v708 = vrsqrt.pop %v637
    %v709 = vmul.f32 %v708, %v637
    %v710 = vmul.f32 %v709, %v708
    %v711 = vmul.f32 0.5, %v710
    %v712 = vsub.f32 1.5, %v711
    %v713 = vmul.f32 %v708, %v712
    %vm714 = vweird.f32 %v637
    %vm715 = vweird.f32 %v708
    %vm716 = vmor %vm714, %vm715
    %v717 = vsel %vm716, %v708, %v713
    %v718 = vmul.f32 %v589, %v647
    %v719 = vmul.f32 %v590, %v657
    %v720 = vmul.f32 %v591, %v667
    %v721 = vmul.f32 %v592, %v677
    %v722 = vmul.f32 %v593, %v687
    %v723 = vmul.f32 %v594, %v697
    %v724 = vmul.f32 %v595, %v707
    %v725 = vmul.f32 %v596, %v717
    %v726 = vmul.f32 %v570, %v570
    %v727 = vmul.f32 %v572, %v572
    %v728 = vmul.f32 %v575, %v575
    %v729 = vmul.f32 %v577, %v577
    %v730 = vmul.f32 %v580, %v580
    %v731 = vmul.f32 %v582, %v582
    %v732 = vmul.f32 %v585, %v585
    %v733 = vmul.f32 %v587, %v587
    %v734 = vsel %vm605, %v726, 0.0
    %735 = vadd.xlane.f32.xlu0 %v734
    %v736 = vpop.xlane.xlu0 %735
    %v737 = vsel %vm605, %v727, 0.0
    %738 = vadd.xlane.f32.xlu0 %v737
    %v739 = vpop.xlane.xlu0 %738
    %v740 = vsel %vm605, %v728, 0.0
    %741 = vadd.xlane.f32.xlu0 %v740
    %v742 = vpop.xlane.xlu0 %741
    %v743 = vsel %vm605, %v729, 0.0
    %744 = vadd.xlane.f32.xlu0 %v743
    %v745 = vpop.xlane.xlu0 %744
    %v746 = vsel %vm605, %v730, 0.0
    %747 = vadd.xlane.f32.xlu0 %v746
    %v748 = vpop.xlane.xlu0 %747
    %v749 = vsel %vm605, %v731, 0.0
    %750 = vadd.xlane.f32.xlu0 %v749
    %v751 = vpop.xlane.xlu0 %750
    %v752 = vsel %vm605, %v732, 0.0
    %753 = vadd.xlane.f32.xlu0 %v752
    %v754 = vpop.xlane.xlu0 %753
    %v755 = vsel %vm605, %v733, 0.0
    %756 = vadd.xlane.f32.xlu0 %v755
    %v757 = vpop.xlane.xlu0 %756
    %v758 = vmax.f32 %v736, 1e-12
    %v759 = vmax.f32 %v739, 1e-12
    %v760 = vmax.f32 %v742, 1e-12
    %v761 = vmax.f32 %v745, 1e-12
    %v762 = vmax.f32 %v748, 1e-12
    %v763 = vmax.f32 %v751, 1e-12
    %v764 = vmax.f32 %v754, 1e-12
    %v765 = vmax.f32 %v757, 1e-12
    %v766 = vrsqrt.pop %v758
    %v767 = vmul.f32 %v766, %v758
    %v768 = vmul.f32 %v767, %v766
    %v769 = vmul.f32 0.5, %v768
    %v770 = vsub.f32 1.5, %v769
    %v771 = vmul.f32 %v766, %v770
    %vm772 = vweird.f32 %v758
    %vm773 = vweird.f32 %v766
    %vm774 = vmor %vm772, %vm773
    %v775 = vsel %vm774, %v766, %v771
    %v776 = vrsqrt.pop %v759
    %v777 = vmul.f32 %v776, %v759
    %v778 = vmul.f32 %v777, %v776
    %v779 = vmul.f32 0.5, %v778
    %v780 = vsub.f32 1.5, %v779
    %v781 = vmul.f32 %v776, %v780
    %vm782 = vweird.f32 %v759
    %vm783 = vweird.f32 %v776
    %vm784 = vmor %vm782, %vm783
    %v785 = vsel %vm784, %v776, %v781
    %v786 = vrsqrt.pop %v760
    %v787 = vmul.f32 %v786, %v760
    %v788 = vmul.f32 %v787, %v786
    %v789 = vmul.f32 0.5, %v788
    %v790 = vsub.f32 1.5, %v789
    %v791 = vmul.f32 %v786, %v790
    %vm792 = vweird.f32 %v760
    %vm793 = vweird.f32 %v786
    %vm794 = vmor %vm792, %vm793
    %v795 = vsel %vm794, %v786, %v791
    %v796 = vrsqrt.pop %v761
    %v797 = vmul.f32 %v796, %v761
    %v798 = vmul.f32 %v797, %v796
    %v799 = vmul.f32 0.5, %v798
    %v800 = vsub.f32 1.5, %v799
    %v801 = vmul.f32 %v796, %v800
    %vm802 = vweird.f32 %v761
    %vm803 = vweird.f32 %v796
    %vm804 = vmor %vm802, %vm803
    %v805 = vsel %vm804, %v796, %v801
    %v806 = vrsqrt.pop %v762
    %v807 = vmul.f32 %v806, %v762
    %v808 = vmul.f32 %v807, %v806
    %v809 = vmul.f32 0.5, %v808
    %v810 = vsub.f32 1.5, %v809
    %v811 = vmul.f32 %v806, %v810
    %vm812 = vweird.f32 %v762
    %vm813 = vweird.f32 %v806
    %vm814 = vmor %vm812, %vm813
    %v815 = vsel %vm814, %v806, %v811
    %v816 = vrsqrt.pop %v763
    %v817 = vmul.f32 %v816, %v763
    %v818 = vmul.f32 %v817, %v816
    %v819 = vmul.f32 0.5, %v818
    %v820 = vsub.f32 1.5, %v819
    %v821 = vmul.f32 %v816, %v820
    %vm822 = vweird.f32 %v763
    %vm823 = vweird.f32 %v816
    %vm824 = vmor %vm822, %vm823
    %v825 = vsel %vm824, %v816, %v821
    %v826 = vrsqrt.pop %v764
    %v827 = vmul.f32 %v826, %v764
    %v828 = vmul.f32 %v827, %v826
    %v829 = vmul.f32 0.5, %v828
    %v830 = vsub.f32 1.5, %v829
    %v831 = vmul.f32 %v826, %v830
    %vm832 = vweird.f32 %v764
    %vm833 = vweird.f32 %v826
    %vm834 = vmor %vm832, %vm833
    %v835 = vsel %vm834, %v826, %v831
    %v836 = vrsqrt.pop %v765
    %v837 = vmul.f32 %v836, %v765
    %v838 = vmul.f32 %v837, %v836
    %v839 = vmul.f32 0.5, %v838
    %v840 = vsub.f32 1.5, %v839
    %v841 = vmul.f32 %v836, %v840
    %vm842 = vweird.f32 %v765
    %vm843 = vweird.f32 %v836
    %vm844 = vmor %vm842, %vm843
    %v845 = vsel %vm844, %v836, %v841
    %v846 = vmul.f32 %v570, %v775
    %v847 = vmul.f32 %v572, %v785
    %v848 = vmul.f32 %v575, %v795
    %v849 = vmul.f32 %v577, %v805
    %v850 = vmul.f32 %v580, %v815
    %v851 = vmul.f32 %v582, %v825
    %v852 = vmul.f32 %v585, %v835
    %v853 = vmul.f32 %v587, %v845
    %v854 = vmul.f32 %v718, %v846
    %v855 = vmul.f32 %v719, %v847
    %v856 = vmul.f32 %v720, %v848
    %v857 = vmul.f32 %v721, %v849
    %v858 = vmul.f32 %v722, %v850
    %v859 = vmul.f32 %v723, %v851
    %v860 = vmul.f32 %v724, %v852
    %v861 = vmul.f32 %v725, %v853
    %v862 = vsel %vm605, %v854, 0.0
    %863 = vadd.xlane.f32.xlu0 %v862
    %v864 = vpop.xlane.xlu0 %863
    %v865 = vsel %vm605, %v855, 0.0
    %866 = vadd.xlane.f32.xlu0 %v865
    %v867 = vpop.xlane.xlu0 %866
    %v868 = vsel %vm605, %v856, 0.0
    %869 = vadd.xlane.f32.xlu0 %v868
    %v870 = vpop.xlane.xlu0 %869
    %v871 = vsel %vm605, %v857, 0.0
    %872 = vadd.xlane.f32.xlu0 %v871
    %v873 = vpop.xlane.xlu0 %872
    %v874 = vsel %vm605, %v858, 0.0
    %875 = vadd.xlane.f32.xlu0 %v874
    %v876 = vpop.xlane.xlu0 %875
    %v877 = vsel %vm605, %v859, 0.0
    %878 = vadd.xlane.f32.xlu0 %v877
    %v879 = vpop.xlane.xlu0 %878
    %v880 = vsel %vm605, %v860, 0.0
    %881 = vadd.xlane.f32.xlu0 %v880
    %v882 = vpop.xlane.xlu0 %881
    %v883 = vsel %vm605, %v861, 0.0
    %884 = vadd.xlane.f32.xlu0 %v883
    %v885 = vpop.xlane.xlu0 %884
    %v886 = vsub.f32 1.0, %v864
    %v887 = vsub.f32 1.0, %v867
    %v888 = vsub.f32 1.0, %v870
    %v889 = vsub.f32 1.0, %v873
    %v890 = vsub.f32 1.0, %v876
    %v891 = vsub.f32 1.0, %v879
    %v892 = vsub.f32 1.0, %v882
    %v893 = vsub.f32 1.0, %v885
    %v894 = vmax.f32 %v886, 0.0
    %v895 = vmax.f32 %v887, 0.0
    %v896 = vmax.f32 %v888, 0.0
    %v897 = vmax.f32 %v889, 0.0
    %v898 = vmax.f32 %v890, 0.0
    %v899 = vmax.f32 %v891, 0.0
    %v900 = vmax.f32 %v892, 0.0
    %v901 = vmax.f32 %v893, 0.0
    %v902 = vmul.f32 %v894, %v894
    %v903 = vmul.f32 %v895, %v895
    %v904 = vmul.f32 %v896, %v896
    %v905 = vmul.f32 %v897, %v897
    %v906 = vmul.f32 %v898, %v898
    %v907 = vmul.f32 %v899, %v899
    %v908 = vmul.f32 %v900, %v900
    %v909 = vmul.f32 %v901, %v901
    %s910 = sld [smem:[#allocation2 + $0x2]]
    %v911 = vmul.f32 %v902, %v58
    %v912 = vmul.f32 %v903, %v59
    %v913 = vmul.f32 %v904, %v60
    %v914 = vmul.f32 %v905, %v61
    %v915 = vmul.f32 %v906, %v62
    %v916 = vmul.f32 %v907, %v63
    %v917 = vmul.f32 %v908, %v64
    %v918 = vmul.f32 %v909, %v65
    %vm919 = vcmask 7168
    %v920 = vsel %vm919, %v911, 0.0
    %v921 = vsel %vm919, %v912, 0.0
    %v922 = vadd.f32 %v920, %v921
    %v923 = vsel %vm919, %v913, 0.0
    %v924 = vadd.f32 %v922, %v923
    %v925 = vsel %vm919, %v914, 0.0
    %v926 = vadd.f32 %v924, %v925
    %v927 = vsel %vm919, %v915, 0.0
    %v928 = vadd.f32 %v926, %v927
    %v929 = vsel %vm919, %v916, 0.0
    %v930 = vadd.f32 %v928, %v929
    %v931 = vsel %vm919, %v917, 0.0
    %v932 = vadd.f32 %v930, %v931
    %v933 = vsel %vm919, %v918, 0.0
    %v934 = vadd.f32 %v932, %v933
    %935 = vadd.xlane.f32.xlu0 %v934
    %v936 = vpop.xlane.xlu0 %935
    %v937 = vrot.slane %v936, 4
    %v938 = vadd.f32 %v936, %v937
    %v939 = vrot.slane %v938, 2
    %v940 = vadd.f32 %v938, %v939
    %v941 = vrot.slane %v940, 1
    %v942 = vadd.f32 %v940, %v941
    %s943 = vtos %v942
    %v944 = vstv %s943
    %v945 = vstv %s910
    %v946 = vmul.f32 %v944, %v945
    %vm947 = vcmask 0
    %948 = vst.msk [vmem:[#allocation5] sm:$0x1] %vm947, %v946
    // Predicated region
    $region46: #{tpu_custom_call.1} parent=1 // pred_check
      _
    $region47: #{tpu_custom_call.1} parent=1 // pred_check_branch
      %950 = sbr.rel (0) target = $region49
    $region48: #{tpu_custom_call.1} parent=1 // pred_region
      %952 = vsyncadd [#allocation3], 0
      %s954 = sshll.u32 [#allocation5], 4
      %s955 = int_to_ptr.vmem [resolvable:$true] %s954
      %s956 = sshll.u32 %s10, 4
      %s957 = int_to_ptr.hbm [resolvable:$true] %s956
      %959 = dma.vmem_to_hbm [thread:$0]  %s955, 16, %s957, [#allocation3]
    $region49: #{tpu_custom_call.1} parent=1 // pred_fallthru
      _
    // Predicated region
    $region50: #{tpu_custom_call.1} parent=1 // pred_check
      _
    $region51: #{tpu_custom_call.1} parent=1 // pred_check_branch
      %961 = sbr.rel (0) target = $region53
    $region52: #{tpu_custom_call.1} parent=1 // pred_region
      %963 = dma.done [#allocation3], 16
    $region53: #{tpu_custom_call.1} parent=1 // pred_fallthru
      _
    %964 = vsyncpa [#allocation3], 1
    %965 = vsyncpa [#allocation4], 1

</llo_original>
